<compile_context>
chip_gen: v7x
topology: tpu7x:2x2x1
jax: 0.10.0
libtpu: 0.0.40
codegen_flags: <defaults>
</compile_context>

<pallas_src>
import jax
import jax.numpy as jnp
from jax import lax
from jax.experimental import pallas as pl
from jax.experimental.pallas import tpu as pltpu


def edge_detect_kernel(x_ref, o_ref):
    x = x_ref[...].astype(jnp.float32)          # (B, H, W)
    _, H, W = x.shape

    # Hoisted border masks (shape (1, H, W) so jnp.where only broadcasts the
    # trivial leading slab axis).
    col = lax.broadcasted_iota(jnp.int32, (1, H, W), 2)
    row = lax.broadcasted_iota(jnp.int32, (1, H, W), 1)
    first_col = col == 0
    last_col = col == (W - 1)
    first_row = row == 0
    last_row = row == (H - 1)

    # --- spatial gradients via XLU rotations + replicate border fix ---------
    # roll(x, n-1, axis) fetches the "next" neighbor, roll(x, 1, axis) the
    # "previous" one (non-negative shifts only).
    x_r = jnp.where(last_col, x, pltpu.roll(x, W - 1, axis=2))   # x[:, :, j+1]
    x_l = jnp.where(first_col, x, pltpu.roll(x, 1, axis=2))      # x[:, :, j-1]
    x_d = jnp.where(last_row, x, pltpu.roll(x, H - 1, axis=1))   # x[:, i+1, :]
    x_u = jnp.where(first_row, x, pltpu.roll(x, 1, axis=1))      # x[:, i-1, :]

    ddx = x_r - x_l                 # 2*dx   (0.5 folded into the final store)
    ddy = x_d - x_u                 # 2*dy
    s = ddx * ddx + ddy * ddy       # (2*|grad|)^2  >= 0

    # --- separable 3x3 / stride-1 max pool (zero padding is safe: s >= 0) ---
    s_r = jnp.where(last_col, 0.0, pltpu.roll(s, W - 1, axis=2))
    s_l = jnp.where(first_col, 0.0, pltpu.roll(s, 1, axis=2))
    v = jnp.maximum(jnp.maximum(s_l, s), s_r)                    # 1x3 max
    v_d = jnp.where(last_row, 0.0, pltpu.roll(v, H - 1, axis=1))
    v_u = jnp.where(first_row, 0.0, pltpu.roll(v, 1, axis=1))
    m = jnp.maximum(jnp.maximum(v_u, v), v_d)                    # 3x1 max

    # sqrt deferred to the final tile (monotone over s >= 0); 0.5 folded here.
    o_ref[...] = (0.5 * jnp.sqrt(m)).astype(o_ref.dtype)


def _vmem_config():
    """(io_budget_bytes, vmem_limit_bytes) sized against this chip's VMEM."""
    cap = 64 * 1024 * 1024                    # conservative default (v7x per-TC)
    try:
        info = pltpu.get_tpu_info()
        cap = int(getattr(info, "vmem_capacity_bytes", cap))
    except Exception:
        pass
    limit = min(cap * 3 // 4, 96 * 1024 * 1024)   # 48 MiB on v7x, 96 MiB on v5e/v6e
    budget = limit // 2
    return budget, limit


def _choose_channel_batch(nc, h, w, io_itemsize, budget_bytes, n_temps=6):
    """Largest channel batch b such that double-buffered I/O blocks plus the
    in-kernel f32 temporaries fit the budget; capped so the grid keeps >= 4
    steps (>= 2 if nc < 4) for per-core pipelining under megacore sharding."""
    per_chan = (2 * 2) * h * w * io_itemsize + n_temps * h * w * 4
    b = max(1, min(nc, budget_bytes // max(per_chan, 1)))
    if nc >= 4:
        b = min(b, pl.cdiv(nc, 4))
    elif nc >= 2:
        b = min(b, pl.cdiv(nc, 2))
    return int(b)


def edge_detect(x):
    """x: (N, C, H, W) -> (N, C, H, W), same dtype (compute in f32 inside)."""
    N, C, H, W = x.shape
    nc = N * C
    xf = x.reshape(nc, H, W)

    budget, limit = _vmem_config()
    b = _choose_channel_batch(nc, H, W, jnp.dtype(x.dtype).itemsize, budget)
    grid = (pl.cdiv(nc, b),)          # channels independent: padded tail is harmless

    total = nc * H * W
    out = pl.pallas_call(
        edge_detect_kernel,
        out_shape=jax.ShapeDtypeStruct((nc, H, W), x.dtype),
        grid=grid,
        in_specs=[pl.BlockSpec((b, H, W), lambda i: (i, 0, 0))],
        out_specs=pl.BlockSpec((b, H, W), lambda i: (i, 0, 0)),
        compiler_params=pltpu.CompilerParams(
            dimension_semantics=("parallel",),
            vmem_limit_bytes=limit,
        ),
        cost_estimate=pl.CostEstimate(
            flops=18 * total,
            transcendentals=total,
            bytes_accessed=2 * total * jnp.dtype(x.dtype).itemsize,
        ),
    )(xf)
    return out.reshape(N, C, H, W)


def edge_detect_reference(x):
    """Pure-JAX reference (same math, computed independently of the kernel)."""
    N, C, H, W = x.shape
    xp = jnp.pad(x, ((0, 0), (0, 0), (1, 1), (1, 1)), mode="edge")
    dx = 0.5 * (xp[:, :, 1:H + 1, 2:W + 2] - xp[:, :, 1:H + 1, 0:W])
    dy = 0.5 * (xp[:, :, 2:H + 2, 1:W + 1] - xp[:, :, 0:H, 1:W + 1])
    u = jnp.sqrt(dx * dx + dy * dy)
    y = lax.reduce_window(
        u, -jnp.inf, lax.max,
        window_dimensions=(1, 1, 3, 3),
        window_strides=(1, 1, 1, 1),
        padding=((0, 0), (0, 0), (1, 1), (1, 1)),
    )
    return y


if __name__ == "__main__":
    key = jax.random.PRNGKey(0)
    x = jax.random.normal(key, (2, 4, 16, 16), dtype=jnp.float32)

    y = jax.block_until_ready(edge_detect(x))
    y_ref = edge_detect_reference(x)

    assert y.shape == x.shape
    assert jnp.allclose(y, y_ref, atol=1e-5, rtol=1e-5)
    print("KERNEL_OK")
</pallas_src>

<mosaic_0001>
module attributes {stable_mosaic.version = 11 : i64} {
  func.func @edge_detect_kernel(%arg0: i32, %arg1: memref<2x16x16xf32, #tpu.memory_space<vmem>>, %arg2: memref<2x16x16xf32, #tpu.memory_space<vmem>>) attributes {dimension_semantics = [#tpu.dimension_semantics<parallel>], iteration_bounds = array<i64: 4>, scalar_prefetch = 0 : i64, scratch_operands = 0 : i64, tpu.core_type = #tpu.core_type<tc>, window_params = [{transform_indices = @transform_0, window_bounds = array<i64: 2, 16, 16>}, {transform_indices = @transform_1, window_bounds = array<i64: 2, 16, 16>}]} {
    %c0 = arith.constant 0 : index
    %c0_0 = arith.constant 0 : index
    %c0_1 = arith.constant 0 : index
    %0 = vector.load %arg1[%c0, %c0_0, %c0_1] : memref<2x16x16xf32, #tpu.memory_space<vmem>>, vector<2x16x16xf32>
    %1 = tpu.iota {dimensions = array<i32: 2>} : vector<1x16x16xi32>
    %2 = tpu.iota {dimensions = array<i32: 1>} : vector<1x16x16xi32>
    %c0_i32 = arith.constant 0 : i32
    %3 = vector.broadcast %c0_i32 : i32 to vector<1x16x16xi32>
    %4 = arith.cmpi eq, %1, %3 : vector<1x16x16xi32>
    %c15_i32 = arith.constant 15 : i32
    %5 = vector.broadcast %c15_i32 : i32 to vector<1x16x16xi32>
    %6 = arith.cmpi eq, %1, %5 : vector<1x16x16xi32>
    %c0_i32_2 = arith.constant 0 : i32
    %7 = vector.broadcast %c0_i32_2 : i32 to vector<1x16x16xi32>
    %8 = arith.cmpi eq, %2, %7 : vector<1x16x16xi32>
    %c15_i32_3 = arith.constant 15 : i32
    %9 = vector.broadcast %c15_i32_3 : i32 to vector<1x16x16xi32>
    %10 = arith.cmpi eq, %2, %9 : vector<1x16x16xi32>
    %c15_i32_4 = arith.constant 15 : i32
    %11 = tpu.dynamic_rotate %0 by %c15_i32_4 dim 2 : vector<2x16x16xf32>, i32 -> vector<2x16x16xf32>
    %12 = vector.shape_cast %6 : vector<1x16x16xi1> to vector<1x16x16xi1>
    %13 = vector.broadcast %12 : vector<1x16x16xi1> to vector<2x16x16xi1>
    %14 = arith.select %13, %0, %11 : vector<2x16x16xi1>, vector<2x16x16xf32>
    %c1_i32 = arith.constant 1 : i32
    %15 = tpu.dynamic_rotate %0 by %c1_i32 dim 2 : vector<2x16x16xf32>, i32 -> vector<2x16x16xf32>
    %16 = vector.shape_cast %4 : vector<1x16x16xi1> to vector<1x16x16xi1>
    %17 = vector.broadcast %16 : vector<1x16x16xi1> to vector<2x16x16xi1>
    %18 = arith.select %17, %0, %15 : vector<2x16x16xi1>, vector<2x16x16xf32>
    %c15_i32_5 = arith.constant 15 : i32
    %19 = tpu.dynamic_rotate %0 by %c15_i32_5 dim 1 : vector<2x16x16xf32>, i32 -> vector<2x16x16xf32>
    %20 = vector.shape_cast %10 : vector<1x16x16xi1> to vector<1x16x16xi1>
    %21 = vector.broadcast %20 : vector<1x16x16xi1> to vector<2x16x16xi1>
    %22 = arith.select %21, %0, %19 : vector<2x16x16xi1>, vector<2x16x16xf32>
    %c1_i32_6 = arith.constant 1 : i32
    %23 = tpu.dynamic_rotate %0 by %c1_i32_6 dim 1 : vector<2x16x16xf32>, i32 -> vector<2x16x16xf32>
    %24 = vector.shape_cast %8 : vector<1x16x16xi1> to vector<1x16x16xi1>
    %25 = vector.broadcast %24 : vector<1x16x16xi1> to vector<2x16x16xi1>
    %26 = arith.select %25, %0, %23 : vector<2x16x16xi1>, vector<2x16x16xf32>
    %27 = arith.subf %14, %18 : vector<2x16x16xf32>
    %28 = arith.subf %22, %26 : vector<2x16x16xf32>
    %29 = arith.mulf %27, %27 : vector<2x16x16xf32>
    %30 = arith.mulf %28, %28 : vector<2x16x16xf32>
    %31 = arith.addf %29, %30 : vector<2x16x16xf32>
    %c15_i32_7 = arith.constant 15 : i32
    %32 = tpu.dynamic_rotate %31 by %c15_i32_7 dim 2 : vector<2x16x16xf32>, i32 -> vector<2x16x16xf32>
    %cst = arith.constant 0.000000e+00 : f32
    %33 = vector.shape_cast %6 : vector<1x16x16xi1> to vector<1x16x16xi1>
    %34 = vector.broadcast %33 : vector<1x16x16xi1> to vector<2x16x16xi1>
    %35 = vector.broadcast %cst : f32 to vector<2x16x16xf32>
    %36 = arith.select %34, %35, %32 : vector<2x16x16xi1>, vector<2x16x16xf32>
    %c1_i32_8 = arith.constant 1 : i32
    %37 = tpu.dynamic_rotate %31 by %c1_i32_8 dim 2 : vector<2x16x16xf32>, i32 -> vector<2x16x16xf32>
    %cst_9 = arith.constant 0.000000e+00 : f32
    %38 = vector.shape_cast %4 : vector<1x16x16xi1> to vector<1x16x16xi1>
    %39 = vector.broadcast %38 : vector<1x16x16xi1> to vector<2x16x16xi1>
    %40 = vector.broadcast %cst_9 : f32 to vector<2x16x16xf32>
    %41 = arith.select %39, %40, %37 : vector<2x16x16xi1>, vector<2x16x16xf32>
    %42 = arith.maximumf %41, %31 : vector<2x16x16xf32>
    %43 = arith.maximumf %42, %36 : vector<2x16x16xf32>
    %c15_i32_10 = arith.constant 15 : i32
    %44 = tpu.dynamic_rotate %43 by %c15_i32_10 dim 1 : vector<2x16x16xf32>, i32 -> vector<2x16x16xf32>
    %cst_11 = arith.constant 0.000000e+00 : f32
    %45 = vector.shape_cast %10 : vector<1x16x16xi1> to vector<1x16x16xi1>
    %46 = vector.broadcast %45 : vector<1x16x16xi1> to vector<2x16x16xi1>
    %47 = vector.broadcast %cst_11 : f32 to vector<2x16x16xf32>
    %48 = arith.select %46, %47, %44 : vector<2x16x16xi1>, vector<2x16x16xf32>
    %c1_i32_12 = arith.constant 1 : i32
    %49 = tpu.dynamic_rotate %43 by %c1_i32_12 dim 1 : vector<2x16x16xf32>, i32 -> vector<2x16x16xf32>
    %cst_13 = arith.constant 0.000000e+00 : f32
    %50 = vector.shape_cast %8 : vector<1x16x16xi1> to vector<1x16x16xi1>
    %51 = vector.broadcast %50 : vector<1x16x16xi1> to vector<2x16x16xi1>
    %52 = vector.broadcast %cst_13 : f32 to vector<2x16x16xf32>
    %53 = arith.select %51, %52, %49 : vector<2x16x16xi1>, vector<2x16x16xf32>
    %54 = arith.maximumf %53, %43 : vector<2x16x16xf32>
    %55 = arith.maximumf %54, %48 : vector<2x16x16xf32>
    %56 = math.sqrt %55 : vector<2x16x16xf32>
    %cst_14 = arith.constant 5.000000e-01 : f32
    %57 = vector.broadcast %cst_14 : f32 to vector<2x16x16xf32>
    %58 = arith.mulf %57, %56 : vector<2x16x16xf32>
    %c0_15 = arith.constant 0 : index
    %c0_16 = arith.constant 0 : index
    %c0_17 = arith.constant 0 : index
    %59 = vector.load %arg2[%c0_15, %c0_16, %c0_17] : memref<2x16x16xf32, #tpu.memory_space<vmem>>, vector<2x16x16xf32>
    tpu.vector_store %arg2[%c0_15, %c0_16, %c0_17], %58 {strides = array<i32>} : memref<2x16x16xf32, #tpu.memory_space<vmem>>, vector<2x16x16xf32>,
    return
  }
  func.func @transform_0(%arg0: i32) -> (i32, i32, i32) {
    %c0_i32 = arith.constant 0 : i32
    %c0_i32_0 = arith.constant 0 : i32
    %c0_i32_1 = arith.constant 0 : i32
    return %arg0, %c0_i32, %c0_i32_0 : i32, i32, i32
  }
  func.func @transform_1(%arg0: i32) -> (i32, i32, i32) {
    %c0_i32 = arith.constant 0 : i32
    %c0_i32_0 = arith.constant 0 : i32
    %c0_i32_1 = arith.constant 0 : i32
    return %arg0, %c0_i32, %c0_i32_0 : i32, i32, i32
  }
}

</mosaic_0001>

<llo_original>
// kernel: tpu_custom_call.1
$region0: #{tpu_custom_call.1}
  #allocation0 [shape = 'u32[]', space=smem, size = 0x4, offset = 0x4, fixed_abs, tag = 'smem constant byte address 0x4 - core index']
  #allocation1 [shape = 'u32[144,128]{1,0:T(1,128)}', space=vmem, size = 0x12000, scoped, tag = 'internal scratch']
  %s0 = inlined_call_operand.hbm [shape: f32[8,16,16], index: 0, kind: input, shape index: {}]
  %s1 = inlined_call_operand.hbm [shape: f32[8,16,16], index: 1, kind: output, shape index: {}]
  %s2 = sld [smem:[#allocation0]]
  $region41: #{tpu_custom_call.1} parent=0
    _
  %s4 = ssub.s32 1, %s2
  %s5 = scalar_select 0, %s4, %s2
  $region1: #{tpu_custom_call.1} parent=0
    #allocation2 [shape = 'u8[32768]{0}', space=vmem, size = 0x8000, scoped, tag = 'input window, operand 0']
    #allocation3 [shape = 's32[2]{0}', space=sflag, size = 0x8, scoped, tag = 'scoped memory for tpu_custom_call.1']
    #allocation4 [shape = 's32[2]{0}', space=sflag, size = 0x8, scoped, tag = 'scoped memory for tpu_custom_call.1']
    #allocation5 [shape = 'u8[32768]{0}', space=vmem, size = 0x8000, scoped, tag = 'output window, operand 0']
    %6 = vsyncpa [#allocation3], 0
    %s7 = scalar_lea.sflag [#allocation3], 1
    %8 = vsyncpa %s7, 0
    %9 = vsyncpa [#allocation4], 0
    %s10 = scalar_lea.sflag [#allocation4], 1
    %11 = vsyncpa %s10, 0
    loop: start=0, step=1, limit=6
    $region2: #{tpu_custom_call.1} parent=1 // loop_pre_header
      _
    $region3: #{tpu_custom_call.1} parent=1 // loop_header
      %s13 = sphi 0, %s17
      %p14 = scmp.ge.s32.totalorder %s13, 6
      %s23 = sphi 0, %s25
      %s26 = sphi 0, %s23
      %s27 = sphi 0, %s26
      %s43 = sphi 0, %s27
      %s49 = sphi 0, %s51
      %s52 = sphi 0, %s49
      %s53 = sphi 0, %s52
      %s69 = sphi 0, %s53
    $region4: #{tpu_custom_call.1} parent=1 // loop_header_branch
      %16 = sbr.rel (%p14) target = $region8
    $region5: #{tpu_custom_call.1} parent=1 // loop_body
      %s18 = ssub.s32 %s13, 1
      %s19 = ssub.s32 %s13, 2
      %s20 = sadd.s32 %s13, 1
      %s21 = ssub.s32 %s13, %s20
      %p22 = scmp.eq.s32.totalorder %s21, 0
      %s24 = sadd.s32 %s23, 1
      %s25 = scalar_select %p22, %s23, %s24
      %p28 = pneg %p22
      %p29 = scmp.eq.s32.totalorder %s13, 3
      %p30 = por %p28, %p29
      %p31 = scmp.ne.s32.totalorder %s23, %s26
      %p32 = scmp.eq.s32.totalorder %s13, 0
      %p33 = por %p31, %p32
      %p34 = scmp.ne.s32.totalorder %s23, %s26
      %p35 = scmp.eq.s32.totalorder %s18, 3
      %p36 = por %p34, %p35
      %p37 = scmp.ne.s32.totalorder %s26, %s27
      %p38 = scmp.eq.s32.totalorder %s18, 0
      %p39 = por %p37, %p38
      %p40 = scmp.ne.s32.totalorder %s26, %s27
      %p41 = scmp.eq.s32.totalorder %s19, 3
      %p42 = por %p40, %p41
      %p44 = scmp.ne.s32.totalorder %s27, %s43
      %p45 = scmp.eq.s32.totalorder %s19, 0
      %p46 = por %p44, %p45
      %s47 = ssub.s32 %s13, %s20
      %p48 = scmp.eq.s32.totalorder %s47, 0
      %s50 = sadd.s32 %s49, 1
      %s51 = scalar_select %p48, %s49, %s50
      %p54 = pneg %p48
      %p55 = scmp.eq.s32.totalorder %s13, 3
      %p56 = por %p54, %p55
      %p57 = scmp.ne.s32.totalorder %s49, %s52
      %p58 = scmp.eq.s32.totalorder %s13, 0
      %p59 = por %p57, %p58
      %p60 = scmp.ne.s32.totalorder %s49, %s52
      %p61 = scmp.eq.s32.totalorder %s18, 3
      %p62 = por %p60, %p61
      %p63 = scmp.ne.s32.totalorder %s52, %s53
      %p64 = scmp.eq.s32.totalorder %s18, 0
      %p65 = por %p63, %p64
      %p66 = scmp.ne.s32.totalorder %s52, %s53
      %p67 = scmp.eq.s32.totalorder %s19, 3
      %p68 = por %p66, %p67
      %p70 = scmp.ne.s32.totalorder %s53, %s69
      %p71 = scmp.eq.s32.totalorder %s19, 0
      %p72 = por %p70, %p71
      %p73 = scmp.le.s32.totalorder 1, %s13
      %p74 = scmp.lt.s32.totalorder %s13, 5
      %p75 = pnand %p73, %p74
      %p76 = pneg %p75
      // Predicated region
      $region9: #{tpu_custom_call.1} parent=5 // pred_check
        _
      $region10: #{tpu_custom_call.1} parent=5 // pred_check_branch
        %78 = sbr.rel (%p75) target = $region12
      $region11: #{tpu_custom_call.1} parent=5 // pred_region
        %s79 = ssub.s32 %s13, 1
      $region12: #{tpu_custom_call.1} parent=5 // pred_fallthru
        _
      %p80 = scmp.lt.s32.totalorder %s13, 4
      // Predicated region
      $region13: #{tpu_custom_call.1} parent=5 // pred_check
        %p81 = pneg %p80
      $region14: #{tpu_custom_call.1} parent=5 // pred_check_branch
        %83 = sbr.rel (%p81) target = $region16
      $region15: #{tpu_custom_call.1} parent=5 // pred_region
        // Predicated region
        $region17: #{tpu_custom_call.1} parent=15 // pred_check
          %p84 = pneg %p33
        $region18: #{tpu_custom_call.1} parent=15 // pred_check_branch
          %86 = sbr.rel (%p84) target = $region20
        $region19: #{tpu_custom_call.1} parent=15 // pred_region
          %s87 = sand.u32 %s23, 1
          %s88 = scalar_lea.sflag [#allocation3], %s87
          %s89 = sand.u32 %s23, 1
          %s90 = smul.addr %s89, 32
          %s91 = scalar_lea.vmem [#allocation2], %s90
          %s92 = smul.u32 2, %s13
          %s94 = ssub.s32 512, 512
          %95 = vsyncadd %s88, %s94
          %s96 = smul.addr %s92, 2
          %s97 = smul.addr %s96, 128
          %s98 = scalar_lea.hbm %s0, %s97
          %s99 = sshll.u32 %s91, 4
          %s100 = int_to_ptr.vmem [resolvable:$true] %s99
          %105 = dma.hbm_to_vmem [thread:$0]  %s98, 512, %s100, %s88, 128, 128, 8
        $region20: #{tpu_custom_call.1} parent=15 // pred_fallthru
          _
      $region16: #{tpu_custom_call.1} parent=5 // pred_fallthru
        _
      %p106 = scmp.le.s32.totalorder 1, %s13
      %p107 = scmp.lt.s32.totalorder %s13, 5
      %p108 = pnand %p106, %p107
      %p109 = pneg %p108
      // Predicated region
      $region21: #{tpu_custom_call.1} parent=5 // pred_check
        _
      $region22: #{tpu_custom_call.1} parent=5 // pred_check_branch
        %111 = sbr.rel (%p108) target = $region24
      $region23: #{tpu_custom_call.1} parent=5 // pred_region
        %s112 = ssub.s32 %s13, 1
        %s113 = sand.u32 %s26, 1
        %s114 = scalar_lea.sflag [#allocation3], %s113
        %s115 = sand.u32 %s26, 1
        %s116 = smul.addr %s115, 32
        %s117 = scalar_lea.vmem [#allocation2], %s116
        // Predicated region
        $region25: #{tpu_custom_call.1} parent=23 // pred_check
          %p118 = pneg %p39
        $region26: #{tpu_custom_call.1} parent=23 // pred_check_branch
          %120 = sbr.rel (%p118) target = $region28
        $region27: #{tpu_custom_call.1} parent=23 // pred_region
          %121 = dma.done %s114, 512
        $region28: #{tpu_custom_call.1} parent=23 // pred_fallthru
          _
        %s122 = sand.u32 %s26, 1
        %s123 = scalar_lea.sflag [#allocation3], %s122
        %s124 = sand.u32 %s26, 1
        %s125 = smul.addr %s124, 32
        %s126 = scalar_lea.vmem [#allocation2], %s125
        %p127 = pneg %p39
        %p128 = pneg %p36
        %p129 = pneg %p65
        %p130 = pneg %p62
        %s131 = sand.u32 %s52, 1
        %s132 = scalar_lea.sflag [#allocation4], %s131
        %s133 = sand.u32 %s52, 1
        %s134 = smul.addr %s133, 32
        %s135 = scalar_lea.vmem [#allocation5], %s134
        %s136 = smul.u32 2, %s18
        %s137 = smul.u32 2, %s18
        %v138 = vld [vmem:[%s117] sm:$0xff]
        %v139 = vld [vmem:[%s117 + $0x8] sm:$0xff]
        %v140 = vld [vmem:[%s117 + $0x10] sm:$0xff]
        %v141 = vld [vmem:[%s117 + $0x18] sm:$0xff]
        %v142 = vlaneseq
        %v143 = vand.u32 %v142, 127
        %v144 = vlaneseq
        %v145 = vshrl.u32 %v144, 7
        %v146 = vadd.s32 %v145, 8
        %vm147 = vcmp.eq.s32.totalorder %v143, 0
        %vm148 = vcmp.eq.s32.totalorder %v143, 15
        %vm149 = vcmp.eq.s32.totalorder %v145, 0
        %vm150 = vcmp.eq.s32.totalorder %v146, 0
        %vm151 = vcmp.eq.s32.totalorder %v145, 15
        %vm152 = vcmp.eq.s32.totalorder %v146, 15
        %vm153 = vcmask 1047680
        %154 = vrot.lane.b32.xlu0 %v138, 16
        %v155 = vpop.permute.xlu0 %154
        %v156 = vsel %vm153, %v155, %v138
        %157 = vrot.lane.b32.xlu0 %v139, 16
        %v158 = vpop.permute.xlu0 %157
        %v159 = vsel %vm153, %v158, %v139
        %160 = vrot.lane.b32.xlu0 %v140, 16
        %v161 = vpop.permute.xlu0 %160
        %v162 = vsel %vm153, %v161, %v140
        %163 = vrot.lane.b32.xlu0 %v141, 16
        %v164 = vpop.permute.xlu0 %163
        %v165 = vsel %vm153, %v164, %v141
        %166 = vrot.lane.b32.xlu0 %v156, 16
        %v167 = vpop.permute.xlu0 %166
        %168 = vrot.lane.b32.xlu0 %v159, 16
        %v169 = vpop.permute.xlu0 %168
        %170 = vrot.lane.b32.xlu0 %v162, 16
        %v171 = vpop.permute.xlu0 %170
        %172 = vrot.lane.b32.xlu0 %v165, 16
        %v173 = vpop.permute.xlu0 %172
        %v174 = vsel %vm153, %v167, %v138
        %v175 = vsel %vm153, %v169, %v139
        %v176 = vsel %vm153, %v171, %v140
        %v177 = vsel %vm153, %v173, %v141
        %v178 = vsel %vm148, 1, 0
        %vm179 = vcmp.eq.s32.totalorder %v178, 1
        %184 = vrot.lane.b32.xlu0 %v174, 127
        %v185 = vpop.permute.xlu0 %184
        %186 = vrot.lane.b32.xlu0 %v175, 127
        %v187 = vpop.permute.xlu0 %186
        %188 = vrot.lane.b32.xlu0 %v176, 127
        %v189 = vpop.permute.xlu0 %188
        %190 = vrot.lane.b32.xlu0 %v177, 127
        %v191 = vpop.permute.xlu0 %190
        %v196 = vsel %vm179, %v138, %v185
        %v197 = vsel %vm179, %v139, %v187
        %v198 = vsel %vm179, %v140, %v189
        %v199 = vsel %vm179, %v141, %v191
        %v200 = vsel %vm147, 1, 0
        %vm201 = vcmp.eq.s32.totalorder %v200, 1
        %202 = vrot.lane.b32.xlu0 %v174, 113
        %v203 = vpop.permute.xlu0 %202
        %204 = vrot.lane.b32.xlu0 %v175, 113
        %v205 = vpop.permute.xlu0 %204
        %206 = vrot.lane.b32.xlu0 %v176, 113
        %v207 = vpop.permute.xlu0 %206
        %208 = vrot.lane.b32.xlu0 %v177, 113
        %v209 = vpop.permute.xlu0 %208
        %v214 = vsel %vm201, %v138, %v203
        %v215 = vsel %vm201, %v139, %v205
        %v216 = vsel %vm201, %v140, %v207
        %v217 = vsel %vm201, %v141, %v209
        %v218 = vrot.slane %v138, 1
        %v219 = vrot.slane %v140, 1
        %v220 = vrot.slane %v139, 1
        %v221 = vrot.slane %v141, 1
        %vm222 = vcmp.lt.s32.totalorder %v145, 7
        %v223 = vsel %vm222, %v218, %v220
        %v224 = vsel %vm222, %v219, %v221
        %v225 = vsel %vm222, %v220, %v218
        %v226 = vsel %vm222, %v221, %v219
        %v227 = vsel %vm151, 1, 0
        %v228 = vsel %vm152, 1, 0
        %vm229 = vcmp.eq.s32.totalorder %v227, 1
        %vm230 = vcmp.eq.s32.totalorder %v228, 1
        %v231 = vsel %vm229, %v138, %v223
        %v232 = vsel %vm230, %v139, %v225
        %v233 = vsel %vm229, %v140, %v224
        %v234 = vsel %vm230, %v141, %v226
        %v235 = vrot.slane %v138, 7
        %v236 = vrot.slane %v140, 7
        %v237 = vrot.slane %v139, 7
        %v238 = vrot.slane %v141, 7
        %vm239 = vcmp.lt.s32.totalorder %v145, 1
        %v240 = vsel %vm239, %v235, %v237
        %v241 = vsel %vm239, %v236, %v238
        %v242 = vsel %vm239, %v237, %v235
        %v243 = vsel %vm239, %v238, %v236
        %v244 = vsel %vm149, 1, 0
        %v245 = vsel %vm150, 1, 0
        %vm246 = vcmp.eq.s32.totalorder %v244, 1
        %vm247 = vcmp.eq.s32.totalorder %v245, 1
        %v248 = vsel %vm246, %v138, %v242
        %v249 = vsel %vm247, %v139, %v240
        %v250 = vsel %vm246, %v140, %v243
        %v251 = vsel %vm247, %v141, %v241
        %v252 = vsub.f32 %v196, %v214
        %v253 = vsub.f32 %v197, %v215
        %v254 = vsub.f32 %v198, %v216
        %v255 = vsub.f32 %v199, %v217
        %v256 = vsub.f32 %v231, %v248
        %v257 = vsub.f32 %v232, %v249
        %v258 = vsub.f32 %v233, %v250
        %v259 = vsub.f32 %v234, %v251
        %v260 = vmul.f32 %v252, %v252
        %v261 = vmul.f32 %v253, %v253
        %v262 = vmul.f32 %v254, %v254
        %v263 = vmul.f32 %v255, %v255
        %v264 = vmul.f32 %v256, %v256
        %v265 = vmul.f32 %v257, %v257
        %v266 = vmul.f32 %v258, %v258
        %v267 = vmul.f32 %v259, %v259
        %v268 = vadd.f32 %v260, %v264
        %v269 = vadd.f32 %v261, %v265
        %v270 = vadd.f32 %v262, %v266
        %v271 = vadd.f32 %v263, %v267
        %272 = vrot.lane.b32.xlu0 %v268, 16
        %v273 = vpop.permute.xlu0 %272
        %v274 = vsel %vm153, %v273, %v268
        %275 = vrot.lane.b32.xlu0 %v269, 16
        %v276 = vpop.permute.xlu0 %275
        %v277 = vsel %vm153, %v276, %v269
        %278 = vrot.lane.b32.xlu0 %v270, 16
        %v279 = vpop.permute.xlu0 %278
        %v280 = vsel %vm153, %v279, %v270
        %281 = vrot.lane.b32.xlu0 %v271, 16
        %v282 = vpop.permute.xlu0 %281
        %v283 = vsel %vm153, %v282, %v271
        %284 = vrot.lane.b32.xlu0 %v274, 16
        %v285 = vpop.permute.xlu0 %284
        %286 = vrot.lane.b32.xlu0 %v277, 16
        %v287 = vpop.permute.xlu0 %286
        %288 = vrot.lane.b32.xlu0 %v280, 16
        %v289 = vpop.permute.xlu0 %288
        %290 = vrot.lane.b32.xlu0 %v283, 16
        %v291 = vpop.permute.xlu0 %290
        %v292 = vsel %vm153, %v285, %v268
        %v293 = vsel %vm153, %v287, %v269
        %v294 = vsel %vm153, %v289, %v270
        %v295 = vsel %vm153, %v291, %v271
        %300 = vrot.lane.b32.xlu0 %v292, 127
        %v301 = vpop.permute.xlu0 %300
        %302 = vrot.lane.b32.xlu0 %v293, 127
        %v303 = vpop.permute.xlu0 %302
        %304 = vrot.lane.b32.xlu0 %v294, 127
        %v305 = vpop.permute.xlu0 %304
        %306 = vrot.lane.b32.xlu0 %v295, 127
        %v307 = vpop.permute.xlu0 %306
        %v312 = vsel %vm179, 0.0, %v301
        %v313 = vsel %vm179, 0.0, %v303
        %v314 = vsel %vm179, 0.0, %v305
        %v315 = vsel %vm179, 0.0, %v307
        %316 = vrot.lane.b32.xlu0 %v292, 113
        %v317 = vpop.permute.xlu0 %316
        %318 = vrot.lane.b32.xlu0 %v293, 113
        %v319 = vpop.permute.xlu0 %318
        %320 = vrot.lane.b32.xlu0 %v294, 113
        %v321 = vpop.permute.xlu0 %320
        %322 = vrot.lane.b32.xlu0 %v295, 113
        %v323 = vpop.permute.xlu0 %322
        %v328 = vsel %vm201, 0.0, %v317
        %v329 = vsel %vm201, 0.0, %v319
        %v330 = vsel %vm201, 0.0, %v321
        %v331 = vsel %vm201, 0.0, %v323
        %v332 = vmax.f32 %v328, %v268
        %v333 = vmax.f32 %v329, %v269
        %v334 = vmax.f32 %v330, %v270
        %v335 = vmax.f32 %v331, %v271
        %v336 = vmax.f32 %v332, %v312
        %v337 = vmax.f32 %v333, %v313
        %v338 = vmax.f32 %v334, %v314
        %v339 = vmax.f32 %v335, %v315
        %v340 = vrot.slane %v336, 1
        %v341 = vrot.slane %v338, 1
        %v342 = vrot.slane %v337, 1
        %v343 = vrot.slane %v339, 1
        %v344 = vsel %vm222, %v340, %v342
        %v345 = vsel %vm222, %v341, %v343
        %v346 = vsel %vm222, %v342, %v340
        %v347 = vsel %vm222, %v343, %v341
        %v348 = vsel %vm229, 0.0, %v344
        %v349 = vsel %vm230, 0.0, %v346
        %v350 = vsel %vm229, 0.0, %v345
        %v351 = vsel %vm230, 0.0, %v347
        %v352 = vrot.slane %v336, 7
        %v353 = vrot.slane %v338, 7
        %v354 = vrot.slane %v337, 7
        %v355 = vrot.slane %v339, 7
        %v356 = vsel %vm239, %v352, %v354
        %v357 = vsel %vm239, %v353, %v355
        %v358 = vsel %vm239, %v354, %v352
        %v359 = vsel %vm239, %v355, %v353
        %v360 = vsel %vm246, 0.0, %v358
        %v361 = vsel %vm247, 0.0, %v356
        %v362 = vsel %vm246, 0.0, %v359
        %v363 = vsel %vm247, 0.0, %v357
        %v364 = vmax.f32 %v360, %v336
        %v365 = vmax.f32 %v361, %v337
        %v366 = vmax.f32 %v362, %v338
        %v367 = vmax.f32 %v363, %v339
        %v368 = vmax.f32 %v364, %v348
        %v369 = vmax.f32 %v365, %v349
        %v370 = vmax.f32 %v366, %v350
        %v371 = vmax.f32 %v367, %v351
        %v372 = vrsqrt.pop %v368
        %v373 = vmul.f32 %v368, %v372
        %vm374 = vcmp.eq.f32.partialorder %v368, inf
        %v375 = vsel %vm374, %v368, %v373
        %vm376 = vcmp.eq.f32.partialorder %v368, 0.0
        %v377 = vand.u32 %v368, 2147483648
        %v378 = vsel %vm376, %v377, %v375
        %v379 = vrsqrt.pop %v369
        %v380 = vmul.f32 %v369, %v379
        %vm381 = vcmp.eq.f32.partialorder %v369, inf
        %v382 = vsel %vm381, %v369, %v380
        %vm383 = vcmp.eq.f32.partialorder %v369, 0.0
        %v384 = vand.u32 %v369, 2147483648
        %v385 = vsel %vm383, %v384, %v382
        %v386 = vrsqrt.pop %v370
        %v387 = vmul.f32 %v370, %v386
        %vm388 = vcmp.eq.f32.partialorder %v370, inf
        %v389 = vsel %vm388, %v370, %v387
        %vm390 = vcmp.eq.f32.partialorder %v370, 0.0
        %v391 = vand.u32 %v370, 2147483648
        %v392 = vsel %vm390, %v391, %v389
        %v393 = vrsqrt.pop %v371
        %v394 = vmul.f32 %v371, %v393
        %vm395 = vcmp.eq.f32.partialorder %v371, inf
        %v396 = vsel %vm395, %v371, %v394
        %vm397 = vcmp.eq.f32.partialorder %v371, 0.0
        %v398 = vand.u32 %v371, 2147483648
        %v399 = vsel %vm397, %v398, %v396
        %v400 = vmul.f32 %v378, 0.5
        %v401 = vmul.f32 %v385, 0.5
        %v402 = vmul.f32 %v392, 0.5
        %v403 = vmul.f32 %v399, 0.5
        %vm404 = vcmask 130048
        %405 = vst.msk [vmem:[%s135] sm:$0xff] %vm404, %v400
        %406 = vst.msk [vmem:[%s135 + $0x8] sm:$0xff] %vm404, %v401
        %407 = vst.msk [vmem:[%s135 + $0x10] sm:$0xff] %vm404, %v402
        %408 = vst.msk [vmem:[%s135 + $0x18] sm:$0xff] %vm404, %v403
        %s409 = sand.u32 %s52, 1
        %s410 = scalar_lea.sflag [#allocation4], %s409
        %s411 = sand.u32 %s52, 1
        %s412 = smul.addr %s411, 32
        %s413 = scalar_lea.vmem [#allocation5], %s412
        // Predicated region
        $region29: #{tpu_custom_call.1} parent=23 // pred_check
          %p414 = pneg %p62
        $region30: #{tpu_custom_call.1} parent=23 // pred_check_branch
          %416 = sbr.rel (%p414) target = $region32
        $region31: #{tpu_custom_call.1} parent=23 // pred_region
          %s417 = smul.u32 2, %s18
          %s419 = ssub.s32 512, 512
          %420 = vsyncadd %s410, %s419
          %s421 = smul.addr %s417, 2
          %s422 = smul.addr %s421, 128
          %s423 = scalar_lea.hbm %s1, %s422
          %s424 = sshll.u32 %s413, 4
          %s425 = int_to_ptr.vmem [resolvable:$true] %s424
          %430 = dma.vmem_to_hbm [thread:$0]  %s425, 512, %s423, %s410, 128, 128, 8
        $region32: #{tpu_custom_call.1} parent=23 // pred_fallthru
          _
      $region24: #{tpu_custom_call.1} parent=5 // pred_fallthru
        _
      %p431 = scmp.le.s32.totalorder 2, %s13
      // Predicated region
      $region33: #{tpu_custom_call.1} parent=5 // pred_check
        %p432 = pneg %p431
      $region34: #{tpu_custom_call.1} parent=5 // pred_check_branch
        %434 = sbr.rel (%p432) target = $region36
      $region35: #{tpu_custom_call.1} parent=5 // pred_region
        %s435 = ssub.s32 %s13, 2
        // Predicated region
        $region37: #{tpu_custom_call.1} parent=35 // pred_check
          %p436 = pneg %p68
        $region38: #{tpu_custom_call.1} parent=35 // pred_check_branch
          %438 = sbr.rel (%p436) target = $region40
        $region39: #{tpu_custom_call.1} parent=35 // pred_region
          %s439 = sand.u32 %s53, 1
          %s440 = scalar_lea.sflag [#allocation4], %s439
          %s441 = sand.u32 %s53, 1
          %s442 = smul.addr %s441, 32
          %s443 = scalar_lea.vmem [#allocation5], %s442
          %444 = dma.done %s440, 512
        $region40: #{tpu_custom_call.1} parent=35 // pred_fallthru
          _
      $region36: #{tpu_custom_call.1} parent=5 // pred_fallthru
        _
    $region6: #{tpu_custom_call.1} parent=1 // loop_footer
      %s17 = sadd.s32 1, %s13
    $region7: #{tpu_custom_call.1} parent=1 // loop_footer_branch
      %12 = sbr.rel target = $region3
    $region8: #{tpu_custom_call.1} parent=1 // loop_exit
      _
    %445 = vsyncpa [#allocation3], 1
    %s446 = scalar_lea.sflag [#allocation3], 1
    %447 = vsyncpa %s446, 1
    %448 = vsyncpa [#allocation4], 1
    %s449 = scalar_lea.sflag [#allocation4], 1
    %450 = vsyncpa %s449, 1

</llo_original>
